<compile_context>
chip_gen: v7x
topology: tpu7x:2x2x1
jax: 0.10.0
libtpu: 0.0.40
codegen_flags: <defaults>
</compile_context>

<pallas_src>
import math

import jax
import jax.numpy as jnp
from jax.experimental import pallas as pl
from jax.experimental.pallas import tpu as pltpu


# ----------------------------- fused Pallas kernel ------------------------------

def _fused_graph_kernel(scale_ref, x_ref, w0_ref, b0_ref, w1_ref, b1_ref, o_ref):
    # scale_ref: (1,) f32 in SMEM — read once into a register before the epilogue.
    s = scale_ref[0]
    x = x_ref[...].astype(jnp.bfloat16)                              # MXU operand dtype
    h0 = jnp.dot(x, w0_ref[...], preferred_element_type=jnp.float32) + b0_ref[...]
    h1 = jnp.maximum(h0, 0.0)                                        # ReLU (epilogue)
    h2 = (jnp.dot(h1.astype(jnp.bfloat16), w1_ref[...],
                  preferred_element_type=jnp.float32) + b1_ref[...])
    o_ref[...] = (h2 + h0) * s                                       # residual + scale


def fused_sequential_graph(x, scale, w0, b0, w1, b1, *, tb=128):
    """Whole graph (Linear0 -> ReLU -> Linear1 -> +h0 -> *scale) in a single kernel."""
    B, d_in = x.shape
    hid = w0.shape[1]
    assert B % tb == 0, "batch must be a multiple of the batch tile"
    flops = 2 * B * (d_in * hid + hid * hid)
    bytes_accessed = (x.size * 4 + w0.size * 2 + w1.size * 2
                      + b0.size * 4 + b1.size * 4 + B * hid * 4)
    return pl.pallas_call(
        _fused_graph_kernel,
        out_shape=jax.ShapeDtypeStruct((B, hid), jnp.float32),
        grid=(B // tb,),
        in_specs=[
            pl.BlockSpec(memory_space=pltpu.MemorySpace.SMEM),   # scale scalar
            pl.BlockSpec((tb, d_in), lambda i: (i, 0)),          # x: pipelined over batch
            pl.BlockSpec((d_in, hid), lambda i: (0, 0)),         # W0: VMEM-resident
            pl.BlockSpec((1, hid), lambda i: (0, 0)),            # b0
            pl.BlockSpec((hid, hid), lambda i: (0, 0)),          # W1: VMEM-resident
            pl.BlockSpec((1, hid), lambda i: (0, 0)),            # b1
        ],
        out_specs=pl.BlockSpec((tb, hid), lambda i: (i, 0)),
        compiler_params=pltpu.CompilerParams(
            dimension_semantics=("parallel",)),
        cost_estimate=pl.CostEstimate(
            flops=flops, transcendentals=0, bytes_accessed=bytes_accessed),
    )(scale, x, w0, b0, w1, b1)


# ------------------------------- parameters -------------------------------------

class LinearParams:
    def __init__(self, key, fin, fout):
        k1, k2 = jax.random.split(key)
        lim = 1.0 / math.sqrt(fin)  # matches nn.Linear default init bounds
        # Weights stored in bf16 (MXU operand dtype); bias kept f32 for the epilogue.
        self.w = jax.random.uniform(k1, (fin, fout), jnp.float32, -lim, lim
                                    ).astype(jnp.bfloat16)
        self.b = jax.random.uniform(k2, (1, fout), jnp.float32, -lim, lim)


# ----------------------- reference layers (pure JAX) -----------------------------
# Used only inside the faithful SequentialGraph routing port to produce the
# spec-equivalent reference output the fused kernel is checked against.

class RefLinear:
    def __init__(self, p):
        self.p = p

    def __call__(self, x):
        return jnp.dot(x.astype(jnp.bfloat16), self.p.w,
                       preferred_element_type=jnp.float32) + self.p.b


class RefReLU:
    def __call__(self, x):
        return jnp.maximum(x, 0.0)


class RefAdd:
    def __call__(self, xs):  # consumes a list input routed by the graph
        a, b = xs
        return a + b


class RefScale:
    def __call__(self, x, scale):  # `scale` arrives via the `additional` dict
        return x * scale[0]


# --------------------------- SequentialGraph (JAX) -------------------------------

class SequentialGraph:
    """Faithful port of the PyTorch SequentialGraph forward routing."""

    def __init__(self, *args, layers_return=None, graph=None, grads=()):
        self.layers = list(args)
        self.layers_return = layers_return
        self.graph = graph if graph is not None else {}
        self.store_set = set()
        for consumer, entry in self.graph.items():
            src = entry.get('input', None)
            if src is None:
                continue
            if isinstance(src, list):
                for s in src:
                    if s != consumer - 1:
                        self.store_set.add(s)
            elif src != consumer - 1:
                self.store_set.add(src)
        if self.layers_return is not None:
            if isinstance(self.layers_return, list):
                for r in self.layers_return:
                    if r != len(self.layers) - 1:
                        self.store_set.add(r)
            elif self.layers_return != len(self.layers) - 1:
                self.store_set.add(self.layers_return)
        # TODO(synk): `grads` only toggles requires_grad in PyTorch; no forward-pass effect.

    def __call__(self, x, additional):
        num_layers = len(self.layers)
        stored = [None] * num_layers
        current = x
        graph = self.graph
        store_set = self.store_set
        for i, layer in enumerate(self.layers):
            entry = graph.get(i, None)
            if entry is not None:
                rt = entry.get('return', None)
                src = entry.get('input', None)
                add = entry.get('additional', None)
                if src is not None:
                    if isinstance(src, list):
                        inp = [current if s == i - 1 else stored[s] for s in src]
                    else:
                        inp = current if src == i - 1 else stored[src]
                else:
                    inp = current
                if add is not None:
                    current = layer(inp, **{k: additional[k] for k in add})
                else:
                    current = layer(inp)
                if rt is not None:
                    if isinstance(rt, list):
                        current = [current[r] for r in rt]
                    else:
                        current = current[rt]
            else:
                current = layer(current)
            if i in store_set:
                stored[i] = current
        if self.layers_return is None:
            return current
        if isinstance(self.layers_return, list):
            return [current if r == num_layers - 1 else stored[r]
                    for r in self.layers_return]
        else:
            return (current if self.layers_return == num_layers - 1
                    else stored[self.layers_return])


# ------------------------------------ main ---------------------------------------

if __name__ == "__main__":
    B, D_IN, HID, TB = 512, 128, 128, 128

    root = jax.random.PRNGKey(0)
    k_x, k_l0, k_l2 = jax.random.split(root, 3)

    lin0 = LinearParams(k_l0, D_IN, HID)
    lin2 = LinearParams(k_l2, HID, HID)

    x = jax.random.normal(k_x, (B, D_IN), jnp.float32)
    additional = {'scale': jnp.array([0.5], dtype=jnp.float32)}

    # Pallas: the entire graph in one fused, batch-tiled kernel.
    out = fused_sequential_graph(
        x, additional['scale'], lin0.w, lin0.b, lin2.w, lin2.b, tb=TB)
    out = jax.block_until_ready(out)

    # Reference: the same graph routed through the faithful SequentialGraph port
    # (pure-JAX layers), verifying both routing semantics and kernel numerics.
    ref_model = SequentialGraph(
        RefLinear(lin0), RefReLU(), RefLinear(lin2), RefAdd(), RefScale(),
        layers_return=None,
        graph={3: {'input': [2, 0]},           # residual: add(layer2_out, layer0_out)
               4: {'additional': ['scale']}},   # kwarg routed from `additional`
    )
    ref = ref_model(x, additional)

    assert out.shape == (B, HID)
    assert jnp.allclose(out, ref, atol=1e-2, rtol=1e-2), "Pallas output mismatch"

    print("KERNEL_OK")
</pallas_src>

<mosaic_0001>
module attributes {stable_mosaic.version = 11 : i64} {
  func.func @_fused_graph_kernel(%arg0: i32, %arg1: memref<1xf32, #tpu.memory_space<smem>>, %arg2: memref<128x128xf32, #tpu.memory_space<vmem>>, %arg3: memref<128x128xbf16, #tpu.memory_space<vmem>>, %arg4: memref<1x128xf32, #tpu.memory_space<vmem>>, %arg5: memref<128x128xbf16, #tpu.memory_space<vmem>>, %arg6: memref<1x128xf32, #tpu.memory_space<vmem>>, %arg7: memref<128x128xf32, #tpu.memory_space<vmem>>) attributes {dimension_semantics = [#tpu.dimension_semantics<parallel>], iteration_bounds = array<i64: 4>, scalar_prefetch = 0 : i64, scratch_operands = 0 : i64, tpu.core_type = #tpu.core_type<tc>, window_params = [{transform_indices = @transform_0, window_bounds = array<i64: 1>}, {transform_indices = @transform_1, window_bounds = array<i64: 128, 128>}, {pipeline_mode = #tpu.pipeline_mode<synchronous>, transform_indices = @transform_2, window_bounds = array<i64: 128, 128>}, {pipeline_mode = #tpu.pipeline_mode<synchronous>, transform_indices = @transform_3, window_bounds = array<i64: 1, 128>}, {pipeline_mode = #tpu.pipeline_mode<synchronous>, transform_indices = @transform_4, window_bounds = array<i64: 128, 128>}, {pipeline_mode = #tpu.pipeline_mode<synchronous>, transform_indices = @transform_5, window_bounds = array<i64: 1, 128>}, {transform_indices = @transform_6, window_bounds = array<i64: 128, 128>}]} {
    %c0 = arith.constant 0 : index
    %0 = memref.load %arg1[%c0] : memref<1xf32, #tpu.memory_space<smem>>
    %c0_0 = arith.constant 0 : index
    %c0_1 = arith.constant 0 : index
    %1 = vector.load %arg2[%c0_0, %c0_1] : memref<128x128xf32, #tpu.memory_space<vmem>>, vector<128x128xf32>
    %2 = arith.truncf %1 : vector<128x128xf32> to vector<128x128xbf16>
    %c0_2 = arith.constant 0 : index
    %c0_3 = arith.constant 0 : index
    %3 = vector.load %arg3[%c0_2, %c0_3] : memref<128x128xbf16, #tpu.memory_space<vmem>>, vector<128x128xbf16>
    %cst = arith.constant dense<0.000000e+00> : vector<128x128xf32>
    %4 = tpu.matmul %2, %3, %cst {dimension_numbers = #tpu.dot_dimension_numbers<[1], [0], [0], [1], [0, 0, 1, 1], [], []>} : vector<128x128xbf16>, vector<128x128xbf16>, vector<128x128xf32> -> vector<128x128xf32>
    %c0_4 = arith.constant 0 : index
    %c0_5 = arith.constant 0 : index
    %5 = vector.load %arg4[%c0_4, %c0_5] : memref<1x128xf32, #tpu.memory_space<vmem>>, vector<1x128xf32>
    %6 = vector.broadcast %5 : vector<1x128xf32> to vector<128x128xf32>
    %7 = arith.addf %4, %6 : vector<128x128xf32>
    %cst_6 = arith.constant 0.000000e+00 : f32
    %8 = vector.broadcast %cst_6 : f32 to vector<128x128xf32>
    %9 = arith.maximumf %7, %8 : vector<128x128xf32>
    %10 = arith.truncf %9 : vector<128x128xf32> to vector<128x128xbf16>
    %c0_7 = arith.constant 0 : index
    %c0_8 = arith.constant 0 : index
    %11 = vector.load %arg5[%c0_7, %c0_8] : memref<128x128xbf16, #tpu.memory_space<vmem>>, vector<128x128xbf16>
    %cst_9 = arith.constant dense<0.000000e+00> : vector<128x128xf32>
    %12 = tpu.matmul %10, %11, %cst_9 {dimension_numbers = #tpu.dot_dimension_numbers<[1], [0], [0], [1], [0, 0, 1, 1], [], []>} : vector<128x128xbf16>, vector<128x128xbf16>, vector<128x128xf32> -> vector<128x128xf32>
    %c0_10 = arith.constant 0 : index
    %c0_11 = arith.constant 0 : index
    %13 = vector.load %arg6[%c0_10, %c0_11] : memref<1x128xf32, #tpu.memory_space<vmem>>, vector<1x128xf32>
    %14 = vector.broadcast %13 : vector<1x128xf32> to vector<128x128xf32>
    %15 = arith.addf %12, %14 : vector<128x128xf32>
    %16 = arith.addf %15, %7 : vector<128x128xf32>
    %17 = vector.broadcast %0 : f32 to vector<128x128xf32>
    %18 = arith.mulf %16, %17 : vector<128x128xf32>
    %c0_12 = arith.constant 0 : index
    %c0_13 = arith.constant 0 : index
    %19 = vector.load %arg7[%c0_12, %c0_13] : memref<128x128xf32, #tpu.memory_space<vmem>>, vector<128x128xf32>
    tpu.vector_store %arg7[%c0_12, %c0_13], %18 {strides = array<i32>} : memref<128x128xf32, #tpu.memory_space<vmem>>, vector<128x128xf32>,
    return
  }
  func.func @transform_0(%arg0: i32) -> i32 {
    %c0_i32 = arith.constant 0 : i32
    %c0_i32_0 = arith.constant 0 : i32
    return %c0_i32 : i32
  }
  func.func @transform_1(%arg0: i32) -> (i32, i32) {
    %c0_i32 = arith.constant 0 : i32
    %c0_i32_0 = arith.constant 0 : i32
    return %arg0, %c0_i32 : i32, i32
  }
  func.func @transform_2(%arg0: i32) -> (i32, i32) {
    %c0_i32 = arith.constant 0 : i32
    %c0_i32_0 = arith.constant 0 : i32
    %c0_i32_1 = arith.constant 0 : i32
    return %c0_i32, %c0_i32_0 : i32, i32
  }
  func.func @transform_3(%arg0: i32) -> (i32, i32) {
    %c0_i32 = arith.constant 0 : i32
    %c0_i32_0 = arith.constant 0 : i32
    %c0_i32_1 = arith.constant 0 : i32
    return %c0_i32, %c0_i32_0 : i32, i32
  }
  func.func @transform_4(%arg0: i32) -> (i32, i32) {
    %c0_i32 = arith.constant 0 : i32
    %c0_i32_0 = arith.constant 0 : i32
    %c0_i32_1 = arith.constant 0 : i32
    return %c0_i32, %c0_i32_0 : i32, i32
  }
  func.func @transform_5(%arg0: i32) -> (i32, i32) {
    %c0_i32 = arith.constant 0 : i32
    %c0_i32_0 = arith.constant 0 : i32
    %c0_i32_1 = arith.constant 0 : i32
    return %c0_i32, %c0_i32_0 : i32, i32
  }
  func.func @transform_6(%arg0: i32) -> (i32, i32) {
    %c0_i32 = arith.constant 0 : i32
    %c0_i32_0 = arith.constant 0 : i32
    return %arg0, %c0_i32 : i32, i32
  }
}

</mosaic_0001>

<llo_original>
// kernel: tpu_custom_call.1
$region0: #{tpu_custom_call.1}
  #allocation0 [shape = 'u32[]', space=smem, size = 0x4, offset = 0x4, fixed_abs, tag = 'smem constant byte address 0x4 - core index']
  #allocation1 [shape = 'u32[144,128]{1,0:T(1,128)}', space=vmem, size = 0x12000, scoped, tag = 'internal scratch']
  #allocation2 [shape = 'f32[1]{0:T(128)S(6)}', space=smem, size = 0x200, scoped, tag = 'scoped memory for tpu_custom_call.1']
  %s0 = inlined_call_operand.<no memory space> [shape: f32[1], index: 0, kind: input, shape index: {}]
  %s1 = inlined_call_operand.hbm [shape: f32[512,128], index: 1, kind: input, shape index: {}]
  %s2 = inlined_call_operand.hbm [shape: bf16[128,128], index: 2, kind: input, shape index: {}]
  %s3 = inlined_call_operand.vmem [shape: f32[1,128], index: 3, kind: input, shape index: {}]
  %s4 = inlined_call_operand.hbm [shape: bf16[128,128], index: 4, kind: input, shape index: {}]
  %s5 = inlined_call_operand.vmem [shape: f32[1,128], index: 5, kind: input, shape index: {}]
  %s6 = inlined_call_operand.hbm [shape: f32[512,128], index: 6, kind: output, shape index: {}]
  %s7 = sld [smem:[#allocation0]]
  $region69: #{tpu_custom_call.1} parent=0
    _
  %s9 = ssub.s32 1, %s7
  %s10 = scalar_select 0, %s9, %s7
  %11 = sst [smem:[#allocation2]] %s0
  $region1: #{tpu_custom_call.1} parent=0
    #allocation3 [shape = 'u8[131072]{0}', space=vmem, size = 0x20000, scoped, tag = 'input window, operand 1']
    #allocation4 [shape = 's32[2]{0}', space=sflag, size = 0x8, scoped, tag = 'scoped memory for tpu_custom_call.1']
    #allocation5 [shape = 's32[2]{0}', space=sflag, size = 0x8, scoped, tag = 'scoped memory for tpu_custom_call.1']
    #allocation6 [shape = 'u8[32768]{0}', space=vmem, size = 0x8000, scoped, tag = 'input window, operand 2, single buffered']
    #allocation7 [shape = 's32[1]{0}', space=sflag, size = 0x4, scoped, tag = 'scoped memory for tpu_custom_call.1']
    #allocation8 [shape = 'u8[32768]{0}', space=vmem, size = 0x8000, scoped, tag = 'input window, operand 4, single buffered']
    #allocation9 [shape = 'u8[131072]{0}', space=vmem, size = 0x20000, scoped, tag = 'output window, operand 0']
    %12 = vsyncpa [#allocation4], 0
    %s13 = scalar_lea.sflag [#allocation4], 1
    %14 = vsyncpa %s13, 0
    %15 = vsyncpa [#allocation7], 0
    %16 = vsyncpa [#allocation5], 0
    %s17 = scalar_lea.sflag [#allocation5], 1
    %18 = vsyncpa %s17, 0
    loop: start=0, step=1, limit=6
    $region2: #{tpu_custom_call.1} parent=1 // loop_pre_header
      _
    $region3: #{tpu_custom_call.1} parent=1 // loop_header
      %s20 = sphi 0, %s24
      %p21 = scmp.ge.s32.totalorder %s20, 6
      %s28 = sphi 0, %s28
      %s30 = sphi 0, %s28
      %s31 = sphi 0, %s30
      %s45 = sphi 0, %s31
      %s51 = sphi 0, %s53
      %s54 = sphi 0, %s51
      %s55 = sphi 0, %s54
      %s71 = sphi 0, %s55
      %s75 = sphi 0, %s75
      %s77 = sphi 0, %s75
      %s78 = sphi 0, %s77
      %s92 = sphi 0, %s78
      %s96 = sphi 0, %s96
      %s98 = sphi 0, %s96
      %s99 = sphi 0, %s98
      %s113 = sphi 0, %s99
      %s117 = sphi 0, %s117
      %s119 = sphi 0, %s117
      %s120 = sphi 0, %s119
      %s134 = sphi 0, %s120
      %s138 = sphi 0, %s138
      %s140 = sphi 0, %s138
      %s141 = sphi 0, %s140
      %s155 = sphi 0, %s141
      %s161 = sphi 0, %s163
      %s164 = sphi 0, %s161
      %s165 = sphi 0, %s164
      %s181 = sphi 0, %s165
    $region4: #{tpu_custom_call.1} parent=1 // loop_header_branch
      %23 = sbr.rel (%p21) target = $region8
    $region5: #{tpu_custom_call.1} parent=1 // loop_body
      %s25 = ssub.s32 %s20, 1
      %s26 = ssub.s32 %s20, 2
      %s27 = sadd.s32 %s20, 1
      %s29 = sadd.s32 %s28, 1
      %p32 = scmp.eq.s32.totalorder %s20, 3
      %p33 = scmp.ne.s32.totalorder %s28, %s30
      %p34 = scmp.eq.s32.totalorder %s20, 0
      %p35 = por %p33, %p34
      %p36 = scmp.ne.s32.totalorder %s28, %s30
      %p37 = scmp.eq.s32.totalorder %s25, 3
      %p38 = por %p36, %p37
      %p39 = scmp.ne.s32.totalorder %s30, %s31
      %p40 = scmp.eq.s32.totalorder %s25, 0
      %p41 = por %p39, %p40
      %p42 = scmp.ne.s32.totalorder %s30, %s31
      %p43 = scmp.eq.s32.totalorder %s26, 3
      %p44 = por %p42, %p43
      %p46 = scmp.ne.s32.totalorder %s31, %s45
      %p47 = scmp.eq.s32.totalorder %s26, 0
      %p48 = por %p46, %p47
      %s49 = ssub.s32 %s20, %s27
      %p50 = scmp.eq.s32.totalorder %s49, 0
      %s52 = sadd.s32 %s51, 1
      %s53 = scalar_select %p50, %s51, %s52
      %p56 = pneg %p50
      %p57 = scmp.eq.s32.totalorder %s20, 3
      %p58 = por %p56, %p57
      %p59 = scmp.ne.s32.totalorder %s51, %s54
      %p60 = scmp.eq.s32.totalorder %s20, 0
      %p61 = por %p59, %p60
      %p62 = scmp.ne.s32.totalorder %s51, %s54
      %p63 = scmp.eq.s32.totalorder %s25, 3
      %p64 = por %p62, %p63
      %p65 = scmp.ne.s32.totalorder %s54, %s55
      %p66 = scmp.eq.s32.totalorder %s25, 0
      %p67 = por %p65, %p66
      %p68 = scmp.ne.s32.totalorder %s54, %s55
      %p69 = scmp.eq.s32.totalorder %s26, 3
      %p70 = por %p68, %p69
      %p72 = scmp.ne.s32.totalorder %s55, %s71
      %p73 = scmp.eq.s32.totalorder %s26, 0
      %p74 = por %p72, %p73
      %s76 = sadd.s32 %s75, 1
      %p79 = scmp.eq.s32.totalorder %s20, 3
      %p80 = scmp.ne.s32.totalorder %s75, %s77
      %p81 = scmp.eq.s32.totalorder %s20, 0
      %p82 = por %p80, %p81
      %p83 = scmp.ne.s32.totalorder %s75, %s77
      %p84 = scmp.eq.s32.totalorder %s25, 3
      %p85 = por %p83, %p84
      %p86 = scmp.ne.s32.totalorder %s77, %s78
      %p87 = scmp.eq.s32.totalorder %s25, 0
      %p88 = por %p86, %p87
      %p89 = scmp.ne.s32.totalorder %s77, %s78
      %p90 = scmp.eq.s32.totalorder %s26, 3
      %p91 = por %p89, %p90
      %p93 = scmp.ne.s32.totalorder %s78, %s92
      %p94 = scmp.eq.s32.totalorder %s26, 0
      %p95 = por %p93, %p94
      %s97 = sadd.s32 %s96, 1
      %p100 = scmp.eq.s32.totalorder %s20, 3
      %p101 = scmp.ne.s32.totalorder %s96, %s98
      %p102 = scmp.eq.s32.totalorder %s20, 0
      %p103 = por %p101, %p102
      %p104 = scmp.ne.s32.totalorder %s96, %s98
      %p105 = scmp.eq.s32.totalorder %s25, 3
      %p106 = por %p104, %p105
      %p107 = scmp.ne.s32.totalorder %s98, %s99
      %p108 = scmp.eq.s32.totalorder %s25, 0
      %p109 = por %p107, %p108
      %p110 = scmp.ne.s32.totalorder %s98, %s99
      %p111 = scmp.eq.s32.totalorder %s26, 3
      %p112 = por %p110, %p111
      %p114 = scmp.ne.s32.totalorder %s99, %s113
      %p115 = scmp.eq.s32.totalorder %s26, 0
      %p116 = por %p114, %p115
      %s118 = sadd.s32 %s117, 1
      %p121 = scmp.eq.s32.totalorder %s20, 3
      %p122 = scmp.ne.s32.totalorder %s117, %s119
      %p123 = scmp.eq.s32.totalorder %s20, 0
      %p124 = por %p122, %p123
      %p125 = scmp.ne.s32.totalorder %s117, %s119
      %p126 = scmp.eq.s32.totalorder %s25, 3
      %p127 = por %p125, %p126
      %p128 = scmp.ne.s32.totalorder %s119, %s120
      %p129 = scmp.eq.s32.totalorder %s25, 0
      %p130 = por %p128, %p129
      %p131 = scmp.ne.s32.totalorder %s119, %s120
      %p132 = scmp.eq.s32.totalorder %s26, 3
      %p133 = por %p131, %p132
      %p135 = scmp.ne.s32.totalorder %s120, %s134
      %p136 = scmp.eq.s32.totalorder %s26, 0
      %p137 = por %p135, %p136
      %s139 = sadd.s32 %s138, 1
      %p142 = scmp.eq.s32.totalorder %s20, 3
      %p143 = scmp.ne.s32.totalorder %s138, %s140
      %p144 = scmp.eq.s32.totalorder %s20, 0
      %p145 = por %p143, %p144
      %p146 = scmp.ne.s32.totalorder %s138, %s140
      %p147 = scmp.eq.s32.totalorder %s25, 3
      %p148 = por %p146, %p147
      %p149 = scmp.ne.s32.totalorder %s140, %s141
      %p150 = scmp.eq.s32.totalorder %s25, 0
      %p151 = por %p149, %p150
      %p152 = scmp.ne.s32.totalorder %s140, %s141
      %p153 = scmp.eq.s32.totalorder %s26, 3
      %p154 = por %p152, %p153
      %p156 = scmp.ne.s32.totalorder %s141, %s155
      %p157 = scmp.eq.s32.totalorder %s26, 0
      %p158 = por %p156, %p157
      %s159 = ssub.s32 %s20, %s27
      %p160 = scmp.eq.s32.totalorder %s159, 0
      %s162 = sadd.s32 %s161, 1
      %s163 = scalar_select %p160, %s161, %s162
      %p166 = pneg %p160
      %p167 = scmp.eq.s32.totalorder %s20, 3
      %p168 = por %p166, %p167
      %p169 = scmp.ne.s32.totalorder %s161, %s164
      %p170 = scmp.eq.s32.totalorder %s20, 0
      %p171 = por %p169, %p170
      %p172 = scmp.ne.s32.totalorder %s161, %s164
      %p173 = scmp.eq.s32.totalorder %s25, 3
      %p174 = por %p172, %p173
      %p175 = scmp.ne.s32.totalorder %s164, %s165
      %p176 = scmp.eq.s32.totalorder %s25, 0
      %p177 = por %p175, %p176
      %p178 = scmp.ne.s32.totalorder %s164, %s165
      %p179 = scmp.eq.s32.totalorder %s26, 3
      %p180 = por %p178, %p179
      %p182 = scmp.ne.s32.totalorder %s165, %s181
      %p183 = scmp.eq.s32.totalorder %s26, 0
      %p184 = por %p182, %p183
      %p185 = scmp.le.s32.totalorder 1, %s20
      %p186 = scmp.lt.s32.totalorder %s20, 5
      %p187 = pnand %p185, %p186
      %p188 = pneg %p187
      // Predicated region
      $region9: #{tpu_custom_call.1} parent=5 // pred_check
        _
      $region10: #{tpu_custom_call.1} parent=5 // pred_check_branch
        %190 = sbr.rel (%p187) target = $region12
      $region11: #{tpu_custom_call.1} parent=5 // pred_region
        %s191 = ssub.s32 %s20, 1
        // Predicated region
        $region13: #{tpu_custom_call.1} parent=11 // pred_check
          %p192 = pneg %p41
        $region14: #{tpu_custom_call.1} parent=11 // pred_check_branch
          %194 = sbr.rel (%p192) target = $region16
        $region15: #{tpu_custom_call.1} parent=11 // pred_region
          _
        $region16: #{tpu_custom_call.1} parent=11 // pred_fallthru
          _
        // Predicated region
        $region17: #{tpu_custom_call.1} parent=11 // pred_check
          %p195 = pneg %p88
        $region18: #{tpu_custom_call.1} parent=11 // pred_check_branch
          %197 = sbr.rel (%p195) target = $region20
        $region19: #{tpu_custom_call.1} parent=11 // pred_region
          %s199 = ssub.s32 1024, 1024
          %200 = vsyncadd [#allocation7], %s199
          %s201 = sshll.u32 [#allocation6], 4
          %s202 = int_to_ptr.vmem [resolvable:$true] %s201
          %207 = dma.hbm_to_vmem [thread:$0]  %s2, 1024, %s202, [#allocation7], 64, 64, 4
        $region20: #{tpu_custom_call.1} parent=11 // pred_fallthru
          _
        // Predicated region
        $region21: #{tpu_custom_call.1} parent=11 // pred_check
          %p208 = pneg %p109
        $region22: #{tpu_custom_call.1} parent=11 // pred_check_branch
          %210 = sbr.rel (%p208) target = $region24
        $region23: #{tpu_custom_call.1} parent=11 // pred_region
          _
        $region24: #{tpu_custom_call.1} parent=11 // pred_fallthru
          _
        // Predicated region
        $region25: #{tpu_custom_call.1} parent=11 // pred_check
          %p211 = pneg %p130
        $region26: #{tpu_custom_call.1} parent=11 // pred_check_branch
          %213 = sbr.rel (%p211) target = $region28
        $region27: #{tpu_custom_call.1} parent=11 // pred_region
          %s215 = ssub.s32 1024, 1024
          %216 = vsyncadd [#allocation7], %s215
          %s217 = sshll.u32 [#allocation8], 4
          %s218 = int_to_ptr.vmem [resolvable:$true] %s217
          %223 = dma.hbm_to_vmem [thread:$0]  %s4, 1024, %s218, [#allocation7], 64, 64, 4
        $region28: #{tpu_custom_call.1} parent=11 // pred_fallthru
          _
        // Predicated region
        $region29: #{tpu_custom_call.1} parent=11 // pred_check
          %p224 = pneg %p151
        $region30: #{tpu_custom_call.1} parent=11 // pred_check_branch
          %226 = sbr.rel (%p224) target = $region32
        $region31: #{tpu_custom_call.1} parent=11 // pred_region
          _
        $region32: #{tpu_custom_call.1} parent=11 // pred_fallthru
          _
      $region12: #{tpu_custom_call.1} parent=5 // pred_fallthru
        _
      %p227 = scmp.lt.s32.totalorder %s20, 4
      // Predicated region
      $region33: #{tpu_custom_call.1} parent=5 // pred_check
        %p228 = pneg %p227
      $region34: #{tpu_custom_call.1} parent=5 // pred_check_branch
        %230 = sbr.rel (%p228) target = $region36
      $region35: #{tpu_custom_call.1} parent=5 // pred_region
        // Predicated region
        $region37: #{tpu_custom_call.1} parent=35 // pred_check
          %p231 = pneg %p61
        $region38: #{tpu_custom_call.1} parent=35 // pred_check_branch
          %233 = sbr.rel (%p231) target = $region40
        $region39: #{tpu_custom_call.1} parent=35 // pred_region
          %s234 = sand.u32 %s51, 1
          %s235 = scalar_lea.sflag [#allocation4], %s234
          %s236 = sand.u32 %s51, 1
          %s237 = smul.addr %s236, 128
          %s238 = scalar_lea.vmem [#allocation3], %s237
          %s239 = smul.u32 16, %s20
          %s241 = ssub.s32 2048, 2048
          %242 = vsyncadd %s235, %s241
          %s243 = smul.addr %s239, 128
          %s244 = scalar_lea.hbm %s1, %s243
          %s245 = sshll.u32 %s238, 4
          %s246 = int_to_ptr.vmem [resolvable:$true] %s245
          %251 = dma.hbm_to_vmem [thread:$0]  %s244, 2048, %s246, %s235, 128, 128, 8
        $region40: #{tpu_custom_call.1} parent=35 // pred_fallthru
          _
      $region36: #{tpu_custom_call.1} parent=5 // pred_fallthru
        _
      %p252 = scmp.le.s32.totalorder 1, %s20
      %p253 = scmp.lt.s32.totalorder %s20, 5
      %p254 = pnand %p252, %p253
      %p255 = pneg %p254
      // Predicated region
      $region41: #{tpu_custom_call.1} parent=5 // pred_check
        _
      $region42: #{tpu_custom_call.1} parent=5 // pred_check_branch
        %257 = sbr.rel (%p254) target = $region44
      $region43: #{tpu_custom_call.1} parent=5 // pred_region
        %s258 = ssub.s32 %s20, 1
        %s259 = sand.u32 %s54, 1
        %s260 = scalar_lea.sflag [#allocation4], %s259
        %s261 = sand.u32 %s54, 1
        %s262 = smul.addr %s261, 128
        %s263 = scalar_lea.vmem [#allocation3], %s262
        // Predicated region
        $region45: #{tpu_custom_call.1} parent=43 // pred_check
          %p264 = pneg %p67
        $region46: #{tpu_custom_call.1} parent=43 // pred_check_branch
          %266 = sbr.rel (%p264) target = $region48
        $region47: #{tpu_custom_call.1} parent=43 // pred_region
          %267 = dma.done %s260, 2048
        $region48: #{tpu_custom_call.1} parent=43 // pred_fallthru
          _
        // Predicated region
        $region49: #{tpu_custom_call.1} parent=43 // pred_check
          %p268 = pneg %p88
        $region50: #{tpu_custom_call.1} parent=43 // pred_check_branch
          %270 = sbr.rel (%p268) target = $region52
        $region51: #{tpu_custom_call.1} parent=43 // pred_region
          %271 = dma.done [#allocation7], 1024
        $region52: #{tpu_custom_call.1} parent=43 // pred_fallthru
          _
        // Predicated region
        $region53: #{tpu_custom_call.1} parent=43 // pred_check
          %p272 = pneg %p130
        $region54: #{tpu_custom_call.1} parent=43 // pred_check_branch
          %274 = sbr.rel (%p272) target = $region56
        $region55: #{tpu_custom_call.1} parent=43 // pred_region
          %275 = dma.done [#allocation7], 1024
        $region56: #{tpu_custom_call.1} parent=43 // pred_fallthru
          _
        %p276 = pneg %p41
        %p277 = pneg %p38
        %s278 = sand.u32 %s54, 1
        %s279 = scalar_lea.sflag [#allocation4], %s278
        %s280 = sand.u32 %s54, 1
        %s281 = smul.addr %s280, 128
        %s282 = scalar_lea.vmem [#allocation3], %s281
        %p283 = pneg %p67
        %p284 = pneg %p64
        %p285 = pneg %p88
        %p286 = pneg %p85
        %p287 = pneg %p109
        %p288 = pneg %p106
        %p289 = pneg %p130
        %p290 = pneg %p127
        %p291 = pneg %p151
        %p292 = pneg %p148
        %p293 = pneg %p177
        %p294 = pneg %p174
        %s295 = sand.u32 %s164, 1
        %s296 = scalar_lea.sflag [#allocation5], %s295
        %s297 = sand.u32 %s164, 1
        %s298 = smul.addr %s297, 128
        %s299 = scalar_lea.vmem [#allocation9], %s298
        %s300 = smul.u32 16, %s25
        %s301 = smul.u32 16, %s25
        %s303 = sld [smem:[#allocation2]]
        %v304 = vld [vmem:[%s263] sm:$0xff]
        %v305 = vld [vmem:[%s263 + $0x8] sm:$0xff]
        %v306 = vld [vmem:[%s263 + $0x10] sm:$0xff]
        %v307 = vld [vmem:[%s263 + $0x18] sm:$0xff]
        %v308 = vld [vmem:[%s263 + $0x20] sm:$0xff]
        %v309 = vld [vmem:[%s263 + $0x28] sm:$0xff]
        %v310 = vld [vmem:[%s263 + $0x30] sm:$0xff]
        %v311 = vld [vmem:[%s263 + $0x38] sm:$0xff]
        %v312 = vld [vmem:[%s263 + $0x40] sm:$0xff]
        %v313 = vld [vmem:[%s263 + $0x48] sm:$0xff]
        %v314 = vld [vmem:[%s263 + $0x50] sm:$0xff]
        %v315 = vld [vmem:[%s263 + $0x58] sm:$0xff]
        %v316 = vld [vmem:[%s263 + $0x60] sm:$0xff]
        %v317 = vld [vmem:[%s263 + $0x68] sm:$0xff]
        %v318 = vld [vmem:[%s263 + $0x70] sm:$0xff]
        %v319 = vld [vmem:[%s263 + $0x78] sm:$0xff]
        %v320 = vpack.c.bf16 %v305, %v304
        %v321 = vpack.c.bf16 %v307, %v306
        %v322 = vpack.c.bf16 %v309, %v308
        %v323 = vpack.c.bf16 %v311, %v310
        %v324 = vpack.c.bf16 %v313, %v312
        %v325 = vpack.c.bf16 %v315, %v314
        %v326 = vpack.c.bf16 %v317, %v316
        %v327 = vpack.c.bf16 %v319, %v318
        %v328 = vld [vmem:[#allocation6] sm:$0xf]
        %v329 = vld [vmem:[#allocation6 + $0x4] sm:$0xf]
        %v330 = vld [vmem:[#allocation6 + $0x8] sm:$0xf]
        %v331 = vld [vmem:[#allocation6 + $0xc] sm:$0xf]
        %v332 = vld [vmem:[#allocation6 + $0x10] sm:$0xf]
        %v333 = vld [vmem:[#allocation6 + $0x14] sm:$0xf]
        %v334 = vld [vmem:[#allocation6 + $0x18] sm:$0xf]
        %v335 = vld [vmem:[#allocation6 + $0x1c] sm:$0xf]
        %v336 = vld [vmem:[#allocation6 + $0x20] sm:$0xf]
        %v337 = vld [vmem:[#allocation6 + $0x24] sm:$0xf]
        %v338 = vld [vmem:[#allocation6 + $0x28] sm:$0xf]
        %v339 = vld [vmem:[#allocation6 + $0x2c] sm:$0xf]
        %v340 = vld [vmem:[#allocation6 + $0x30] sm:$0xf]
        %v341 = vld [vmem:[#allocation6 + $0x34] sm:$0xf]
        %v342 = vld [vmem:[#allocation6 + $0x38] sm:$0xf]
        %v343 = vld [vmem:[#allocation6 + $0x3c] sm:$0xf]
        %v344 = vld [vmem:[%s3] sm:$0x1]
        %v346 = vlaneseq
        %v347 = vshrl.u32 %v346, 7
        %v348 = vsub.s32 0, %v347
        %v349 = vrot.slane %v344, %v348
        %v367 = vunpack.c.l.b16 %v328
        %v368 = vunpack.c.l.b16 %v329
        %v369 = vunpack.c.l.b16 %v330
        %v370 = vunpack.c.l.b16 %v331
        %v371 = vunpack.c.l.b16 %v332
        %v372 = vunpack.c.l.b16 %v333
        %v373 = vunpack.c.l.b16 %v334
        %v374 = vunpack.c.l.b16 %v335
        %v375 = vunpack.c.l.b16 %v336
        %v376 = vunpack.c.l.b16 %v337
        %v377 = vunpack.c.l.b16 %v338
        %v378 = vunpack.c.l.b16 %v339
        %v379 = vunpack.c.l.b16 %v340
        %v380 = vunpack.c.l.b16 %v341
        %v381 = vunpack.c.l.b16 %v342
        %v382 = vunpack.c.l.b16 %v343
        %v383 = vpack.c.b16 %v368, %v367
        %v384 = vpack.c.b16 %v370, %v369
        %v385 = vpack.c.b16 %v372, %v371
        %v386 = vpack.c.b16 %v374, %v373
        %v387 = vpack.c.b16 %v376, %v375
        %v388 = vpack.c.b16 %v378, %v377
        %v389 = vpack.c.b16 %v380, %v379
        %v390 = vpack.c.b16 %v382, %v381
        %399 = vmatprep.subr.bf16.mxu0 0
        %400 = vmatpush1.bf16.msra.mxu0 %v383
        %401 = vmatprep.subr.bf16.mxu0 0
        %402 = vmatpush1.bf16.msra.mxu0 %v384
        %403 = vmatprep.subr.bf16.mxu0 0
        %404 = vmatpush1.bf16.msra.mxu0 %v385
        %405 = vmatprep.subr.bf16.mxu0 0
        %406 = vmatpush1.bf16.msra.mxu0 %v386
        %407 = vmatprep.subr.bf16.mxu0 0
        %408 = vmatpush1.bf16.msra.mxu0 %v387
        %409 = vmatprep.subr.bf16.mxu0 0
        %410 = vmatpush1.bf16.msra.mxu0 %v388
        %411 = vmatprep.subr.bf16.mxu0 0
        %412 = vmatpush1.bf16.msra.mxu0 %v389
        %413 = vmatprep.subr.bf16.mxu0 0
        %414 = vmatpush1.bf16.msra.mxu0 %v390
        %415 = vmatprep.subr.bf16.mxu0 0
        %416 = vmatpush1.bf16.msra.mxu0 0
        %417 = vmatprep.subr.bf16.mxu0 0
        %418 = vmatpush1.bf16.msra.mxu0 0
        %419 = vmatprep.subr.bf16.mxu0 0
        %420 = vmatpush1.bf16.msra.mxu0 0
        %421 = vmatprep.subr.bf16.mxu0 0
        %422 = vmatpush1.bf16.msra.mxu0 0
        %423 = vmatprep.subr.bf16.mxu0 0
        %424 = vmatpush1.bf16.msra.mxu0 0
        %425 = vmatprep.subr.bf16.mxu0 0
        %426 = vmatpush1.bf16.msra.mxu0 0
        %427 = vmatprep.subr.bf16.mxu0 0
        %428 = vmatpush1.bf16.msra.mxu0 0
        %429 = vmatprep.subr.bf16.mxu0 0
        %430 = vmatpush1.bf16.msra.mxu0 0
        %431 = vmatprep.mubr.bf16.mxu0 0
        %432 = vmatmul.mubr.bf16.gmra.mrb[0].mxu0 %v320
        %v433 = vpop.f32.mrb[0].mxu0
        %v434 = vadd.f32 %v349, %v433
        %v435 = vpop.f32.mrb[0].mxu0
        %v436 = vpop.f32.mrb[0].mxu0
        %v437 = vadd.f32 %v349, %v436
        %v438 = vpop.f32.mrb[0].mxu0
        %439 = vmatprep.mubr.bf16.mxu0 0
        %440 = vmatmul.mubr.bf16.gmra.mrb[0].mxu0 %v321
        %v441 = vpop.f32.mrb[0].mxu0
        %v442 = vadd.f32 %v349, %v441
        %v443 = vpop.f32.mrb[0].mxu0
        %v444 = vpop.f32.mrb[0].mxu0
        %v445 = vadd.f32 %v349, %v444
        %v446 = vpop.f32.mrb[0].mxu0
        %447 = vmatprep.mubr.bf16.mxu0 0
        %448 = vmatmul.mubr.bf16.gmra.mrb[0].mxu0 %v322
        %v449 = vpop.f32.mrb[0].mxu0
        %v450 = vadd.f32 %v349, %v449
        %v451 = vpop.f32.mrb[0].mxu0
        %v452 = vpop.f32.mrb[0].mxu0
        %v453 = vadd.f32 %v349, %v452
        %v454 = vpop.f32.mrb[0].mxu0
        %455 = vmatprep.mubr.bf16.mxu0 0
        %456 = vmatmul.mubr.bf16.gmra.mrb[0].mxu0 %v323
        %v457 = vpop.f32.mrb[0].mxu0
        %v458 = vadd.f32 %v349, %v457
        %v459 = vpop.f32.mrb[0].mxu0
        %v460 = vpop.f32.mrb[0].mxu0
        %v461 = vadd.f32 %v349, %v460
        %v462 = vpop.f32.mrb[0].mxu0
        %463 = vmatprep.mubr.bf16.mxu0 0
        %464 = vmatmul.mubr.bf16.gmra.mrb[0].mxu0 %v324
        %v465 = vpop.f32.mrb[0].mxu0
        %v466 = vadd.f32 %v349, %v465
        %v467 = vpop.f32.mrb[0].mxu0
        %v468 = vpop.f32.mrb[0].mxu0
        %v469 = vadd.f32 %v349, %v468
        %v470 = vpop.f32.mrb[0].mxu0
        %471 = vmatprep.mubr.bf16.mxu0 0
        %472 = vmatmul.mubr.bf16.gmra.mrb[0].mxu0 %v325
        %v473 = vpop.f32.mrb[0].mxu0
        %v474 = vadd.f32 %v349, %v473
        %v475 = vpop.f32.mrb[0].mxu0
        %v476 = vpop.f32.mrb[0].mxu0
        %v477 = vadd.f32 %v349, %v476
        %v478 = vpop.f32.mrb[0].mxu0
        %479 = vmatprep.mubr.bf16.mxu0 0
        %480 = vmatmul.mubr.bf16.gmra.mrb[0].mxu0 %v326
        %v481 = vpop.f32.mrb[0].mxu0
        %v482 = vadd.f32 %v349, %v481
        %v483 = vpop.f32.mrb[0].mxu0
        %v484 = vpop.f32.mrb[0].mxu0
        %v485 = vadd.f32 %v349, %v484
        %v486 = vpop.f32.mrb[0].mxu0
        %487 = vmatprep.mubr.bf16.mxu0 0
        %488 = vmatmul.mubr.bf16.gmra.mrb[0].mxu0 %v327
        %v489 = vpop.f32.mrb[0].mxu0
        %v490 = vadd.f32 %v349, %v489
        %v491 = vpop.f32.mrb[0].mxu0
        %v492 = vpop.f32.mrb[0].mxu0
        %v493 = vadd.f32 %v349, %v492
        %v494 = vpop.f32.mrb[0].mxu0
        %495 = vdwg.mxu0
        %v496 = vmax.f32 %v434, 0.0
        %v497 = vmax.f32 %v437, 0.0
        %v498 = vmax.f32 %v442, 0.0
        %v499 = vmax.f32 %v445, 0.0
        %v500 = vmax.f32 %v450, 0.0
        %v501 = vmax.f32 %v453, 0.0
        %v502 = vmax.f32 %v458, 0.0
        %v503 = vmax.f32 %v461, 0.0
        %v504 = vmax.f32 %v466, 0.0
        %v505 = vmax.f32 %v469, 0.0
        %v506 = vmax.f32 %v474, 0.0
        %v507 = vmax.f32 %v477, 0.0
        %v508 = vmax.f32 %v482, 0.0
        %v509 = vmax.f32 %v485, 0.0
        %v510 = vmax.f32 %v490, 0.0
        %v511 = vmax.f32 %v493, 0.0
        %v512 = vpack.c.bf16 %v497, %v496
        %v513 = vpack.c.bf16 %v499, %v498
        %v514 = vpack.c.bf16 %v501, %v500
        %v515 = vpack.c.bf16 %v503, %v502
        %v516 = vpack.c.bf16 %v505, %v504
        %v517 = vpack.c.bf16 %v507, %v506
        %v518 = vpack.c.bf16 %v509, %v508
        %v519 = vpack.c.bf16 %v511, %v510
        %v520 = vld [vmem:[#allocation8] sm:$0xf]
        %v521 = vld [vmem:[#allocation8 + $0x4] sm:$0xf]
        %v522 = vld [vmem:[#allocation8 + $0x8] sm:$0xf]
        %v523 = vld [vmem:[#allocation8 + $0xc] sm:$0xf]
        %v524 = vld [vmem:[#allocation8 + $0x10] sm:$0xf]
        %v525 = vld [vmem:[#allocation8 + $0x14] sm:$0xf]
        %v526 = vld [vmem:[#allocation8 + $0x18] sm:$0xf]
        %v527 = vld [vmem:[#allocation8 + $0x1c] sm:$0xf]
        %v528 = vld [vmem:[#allocation8 + $0x20] sm:$0xf]
        %v529 = vld [vmem:[#allocation8 + $0x24] sm:$0xf]
        %v530 = vld [vmem:[#allocation8 + $0x28] sm:$0xf]
        %v531 = vld [vmem:[#allocation8 + $0x2c] sm:$0xf]
        %v532 = vld [vmem:[#allocation8 + $0x30] sm:$0xf]
        %v533 = vld [vmem:[#allocation8 + $0x34] sm:$0xf]
        %v534 = vld [vmem:[#allocation8 + $0x38] sm:$0xf]
        %v535 = vld [vmem:[#allocation8 + $0x3c] sm:$0xf]
        %v536 = vld [vmem:[%s5] sm:$0x1]
        %v538 = vlaneseq
        %v539 = vshrl.u32 %v538, 7
        %v540 = vsub.s32 0, %v539
        %v541 = vrot.slane %v536, %v540
        %v559 = vunpack.c.l.b16 %v520
        %v560 = vunpack.c.l.b16 %v521
        %v561 = vunpack.c.l.b16 %v522
        %v562 = vunpack.c.l.b16 %v523
        %v563 = vunpack.c.l.b16 %v524
        %v564 = vunpack.c.l.b16 %v525
        %v565 = vunpack.c.l.b16 %v526
        %v566 = vunpack.c.l.b16 %v527
        %v567 = vunpack.c.l.b16 %v528
        %v568 = vunpack.c.l.b16 %v529
        %v569 = vunpack.c.l.b16 %v530
        %v570 = vunpack.c.l.b16 %v531
        %v571 = vunpack.c.l.b16 %v532
        %v572 = vunpack.c.l.b16 %v533
        %v573 = vunpack.c.l.b16 %v534
        %v574 = vunpack.c.l.b16 %v535
        %v575 = vpack.c.b16 %v560, %v559
        %v576 = vpack.c.b16 %v562, %v561
        %v577 = vpack.c.b16 %v564, %v563
        %v578 = vpack.c.b16 %v566, %v565
        %v579 = vpack.c.b16 %v568, %v567
        %v580 = vpack.c.b16 %v570, %v569
        %v581 = vpack.c.b16 %v572, %v571
        %v582 = vpack.c.b16 %v574, %v573
        %591 = vmatprep.subr.bf16.mxu0 0
        %592 = vmatpush1.bf16.msra.mxu0 %v575
        %593 = vmatprep.subr.bf16.mxu0 0
        %594 = vmatpush1.bf16.msra.mxu0 %v576
        %595 = vmatprep.subr.bf16.mxu0 0
        %596 = vmatpush1.bf16.msra.mxu0 %v577
        %597 = vmatprep.subr.bf16.mxu0 0
        %598 = vmatpush1.bf16.msra.mxu0 %v578
        %599 = vmatprep.subr.bf16.mxu0 0
        %600 = vmatpush1.bf16.msra.mxu0 %v579
        %601 = vmatprep.subr.bf16.mxu0 0
        %602 = vmatpush1.bf16.msra.mxu0 %v580
        %603 = vmatprep.subr.bf16.mxu0 0
        %604 = vmatpush1.bf16.msra.mxu0 %v581
        %605 = vmatprep.subr.bf16.mxu0 0
        %606 = vmatpush1.bf16.msra.mxu0 %v582
        %607 = vmatprep.subr.bf16.mxu0 0
        %608 = vmatpush1.bf16.msra.mxu0 0
        %609 = vmatprep.subr.bf16.mxu0 0
        %610 = vmatpush1.bf16.msra.mxu0 0
        %611 = vmatprep.subr.bf16.mxu0 0
        %612 = vmatpush1.bf16.msra.mxu0 0
        %613 = vmatprep.subr.bf16.mxu0 0
        %614 = vmatpush1.bf16.msra.mxu0 0
        %615 = vmatprep.subr.bf16.mxu0 0
        %616 = vmatpush1.bf16.msra.mxu0 0
        %617 = vmatprep.subr.bf16.mxu0 0
        %618 = vmatpush1.bf16.msra.mxu0 0
        %619 = vmatprep.subr.bf16.mxu0 0
        %620 = vmatpush1.bf16.msra.mxu0 0
        %621 = vmatprep.subr.bf16.mxu0 0
        %622 = vmatpush1.bf16.msra.mxu0 0
        %623 = vmatprep.mubr.bf16.mxu0 0
        %624 = vmatmul.mubr.bf16.gmra.mrb[0].mxu0 %v512
        %v625 = vpop.f32.mrb[0].mxu0
        %v626 = vadd.f32 %v541, %v625
        %v627 = vpop.f32.mrb[0].mxu0
        %v628 = vpop.f32.mrb[0].mxu0
        %v629 = vadd.f32 %v541, %v628
        %v630 = vpop.f32.mrb[0].mxu0
        %631 = vmatprep.mubr.bf16.mxu0 0
        %632 = vmatmul.mubr.bf16.gmra.mrb[0].mxu0 %v513
        %v633 = vpop.f32.mrb[0].mxu0
        %v634 = vadd.f32 %v541, %v633
        %v635 = vpop.f32.mrb[0].mxu0
        %v636 = vpop.f32.mrb[0].mxu0
        %v637 = vadd.f32 %v541, %v636
        %v638 = vpop.f32.mrb[0].mxu0
        %639 = vmatprep.mubr.bf16.mxu0 0
        %640 = vmatmul.mubr.bf16.gmra.mrb[0].mxu0 %v514
        %v641 = vpop.f32.mrb[0].mxu0
        %v642 = vadd.f32 %v541, %v641
        %v643 = vpop.f32.mrb[0].mxu0
        %v644 = vpop.f32.mrb[0].mxu0
        %v645 = vadd.f32 %v541, %v644
        %v646 = vpop.f32.mrb[0].mxu0
        %647 = vmatprep.mubr.bf16.mxu0 0
        %648 = vmatmul.mubr.bf16.gmra.mrb[0].mxu0 %v515
        %v649 = vpop.f32.mrb[0].mxu0
        %v650 = vadd.f32 %v541, %v649
        %v651 = vpop.f32.mrb[0].mxu0
        %v652 = vpop.f32.mrb[0].mxu0
        %v653 = vadd.f32 %v541, %v652
        %v654 = vpop.f32.mrb[0].mxu0
        %655 = vmatprep.mubr.bf16.mxu0 0
        %656 = vmatmul.mubr.bf16.gmra.mrb[0].mxu0 %v516
        %v657 = vpop.f32.mrb[0].mxu0
        %v658 = vadd.f32 %v541, %v657
        %v659 = vpop.f32.mrb[0].mxu0
        %v660 = vpop.f32.mrb[0].mxu0
        %v661 = vadd.f32 %v541, %v660
        %v662 = vpop.f32.mrb[0].mxu0
        %663 = vmatprep.mubr.bf16.mxu0 0
        %664 = vmatmul.mubr.bf16.gmra.mrb[0].mxu0 %v517
        %v665 = vpop.f32.mrb[0].mxu0
        %v666 = vadd.f32 %v541, %v665
        %v667 = vpop.f32.mrb[0].mxu0
        %v668 = vpop.f32.mrb[0].mxu0
        %v669 = vadd.f32 %v541, %v668
        %v670 = vpop.f32.mrb[0].mxu0
        %671 = vmatprep.mubr.bf16.mxu0 0
        %672 = vmatmul.mubr.bf16.gmra.mrb[0].mxu0 %v518
        %v673 = vpop.f32.mrb[0].mxu0
        %v674 = vadd.f32 %v541, %v673
        %v675 = vpop.f32.mrb[0].mxu0
        %v676 = vpop.f32.mrb[0].mxu0
        %v677 = vadd.f32 %v541, %v676
        %v678 = vpop.f32.mrb[0].mxu0
        %679 = vmatprep.mubr.bf16.mxu0 0
        %680 = vmatmul.mubr.bf16.gmra.mrb[0].mxu0 %v519
        %v681 = vpop.f32.mrb[0].mxu0
        %v682 = vadd.f32 %v541, %v681
        %v683 = vpop.f32.mrb[0].mxu0
        %v684 = vpop.f32.mrb[0].mxu0
        %v685 = vadd.f32 %v541, %v684
        %v686 = vpop.f32.mrb[0].mxu0
        %687 = vdwg.mxu0
        %v688 = vadd.f32 %v626, %v434
        %v689 = vadd.f32 %v629, %v437
        %v690 = vadd.f32 %v634, %v442
        %v691 = vadd.f32 %v637, %v445
        %v692 = vadd.f32 %v642, %v450
        %v693 = vadd.f32 %v645, %v453
        %v694 = vadd.f32 %v650, %v458
        %v695 = vadd.f32 %v653, %v461
        %v696 = vadd.f32 %v658, %v466
        %v697 = vadd.f32 %v661, %v469
        %v698 = vadd.f32 %v666, %v474
        %v699 = vadd.f32 %v669, %v477
        %v700 = vadd.f32 %v674, %v482
        %v701 = vadd.f32 %v677, %v485
        %v702 = vadd.f32 %v682, %v490
        %v703 = vadd.f32 %v685, %v493
        %v704 = vstv %s303
        %v705 = vmul.f32 %v688, %v704
        %v706 = vmul.f32 %v689, %v704
        %v707 = vmul.f32 %v690, %v704
        %v708 = vmul.f32 %v691, %v704
        %v709 = vmul.f32 %v692, %v704
        %v710 = vmul.f32 %v693, %v704
        %v711 = vmul.f32 %v694, %v704
        %v712 = vmul.f32 %v695, %v704
        %v713 = vmul.f32 %v696, %v704
        %v714 = vmul.f32 %v697, %v704
        %v715 = vmul.f32 %v698, %v704
        %v716 = vmul.f32 %v699, %v704
        %v717 = vmul.f32 %v700, %v704
        %v718 = vmul.f32 %v701, %v704
        %v719 = vmul.f32 %v702, %v704
        %v720 = vmul.f32 %v703, %v704
        %721 = vst [vmem:[%s299] sm:$0xff] %v705
        %722 = vst [vmem:[%s299 + $0x8] sm:$0xff] %v706
        %723 = vst [vmem:[%s299 + $0x10] sm:$0xff] %v707
        %724 = vst [vmem:[%s299 + $0x18] sm:$0xff] %v708
        %725 = vst [vmem:[%s299 + $0x20] sm:$0xff] %v709
        %726 = vst [vmem:[%s299 + $0x28] sm:$0xff] %v710
        %727 = vst [vmem:[%s299 + $0x30] sm:$0xff] %v711
        %728 = vst [vmem:[%s299 + $0x38] sm:$0xff] %v712
        %729 = vst [vmem:[%s299 + $0x40] sm:$0xff] %v713
        %730 = vst [vmem:[%s299 + $0x48] sm:$0xff] %v714
        %731 = vst [vmem:[%s299 + $0x50] sm:$0xff] %v715
        %732 = vst [vmem:[%s299 + $0x58] sm:$0xff] %v716
        %733 = vst [vmem:[%s299 + $0x60] sm:$0xff] %v717
        %734 = vst [vmem:[%s299 + $0x68] sm:$0xff] %v718
        %735 = vst [vmem:[%s299 + $0x70] sm:$0xff] %v719
        %736 = vst [vmem:[%s299 + $0x78] sm:$0xff] %v720
        %s737 = sand.u32 %s164, 1
        %s738 = scalar_lea.sflag [#allocation5], %s737
        %s739 = sand.u32 %s164, 1
        %s740 = smul.addr %s739, 128
        %s741 = scalar_lea.vmem [#allocation9], %s740
        // Predicated region
        $region57: #{tpu_custom_call.1} parent=43 // pred_check
          %p742 = pneg %p174
        $region58: #{tpu_custom_call.1} parent=43 // pred_check_branch
          %744 = sbr.rel (%p742) target = $region60
        $region59: #{tpu_custom_call.1} parent=43 // pred_region
          %s745 = smul.u32 16, %s25
          %s747 = ssub.s32 2048, 2048
          %748 = vsyncadd %s738, %s747
          %s749 = smul.addr %s745, 128
          %s750 = scalar_lea.hbm %s6, %s749
          %s751 = sshll.u32 %s741, 4
          %s752 = int_to_ptr.vmem [resolvable:$true] %s751
          %757 = dma.vmem_to_hbm [thread:$0]  %s752, 2048, %s750, %s738, 128, 128, 8
        $region60: #{tpu_custom_call.1} parent=43 // pred_fallthru
          _
      $region44: #{tpu_custom_call.1} parent=5 // pred_fallthru
        _
      %p758 = scmp.le.s32.totalorder 2, %s20
      // Predicated region
      $region61: #{tpu_custom_call.1} parent=5 // pred_check
        %p759 = pneg %p758
      $region62: #{tpu_custom_call.1} parent=5 // pred_check_branch
        %761 = sbr.rel (%p759) target = $region64
      $region63: #{tpu_custom_call.1} parent=5 // pred_region
        %s762 = ssub.s32 %s20, 2
        // Predicated region
        $region65: #{tpu_custom_call.1} parent=63 // pred_check
          %p763 = pneg %p180
        $region66: #{tpu_custom_call.1} parent=63 // pred_check_branch
          %765 = sbr.rel (%p763) target = $region68
        $region67: #{tpu_custom_call.1} parent=63 // pred_region
          %s766 = sand.u32 %s165, 1
          %s767 = scalar_lea.sflag [#allocation5], %s766
          %s768 = sand.u32 %s165, 1
          %s769 = smul.addr %s768, 128
          %s770 = scalar_lea.vmem [#allocation9], %s769
          %771 = dma.done %s767, 2048
        $region68: #{tpu_custom_call.1} parent=63 // pred_fallthru
          _
      $region64: #{tpu_custom_call.1} parent=5 // pred_fallthru
        _
    $region6: #{tpu_custom_call.1} parent=1 // loop_footer
      %s24 = sadd.s32 1, %s20
    $region7: #{tpu_custom_call.1} parent=1 // loop_footer_branch
      %19 = sbr.rel target = $region3
    $region8: #{tpu_custom_call.1} parent=1 // loop_exit
      _
    %772 = vsyncpa [#allocation4], 1
    %s773 = scalar_lea.sflag [#allocation4], 1
    %774 = vsyncpa %s773, 1
    %775 = vsyncpa [#allocation7], 1
    %776 = vsyncpa [#allocation5], 1
    %s777 = scalar_lea.sflag [#allocation5], 1
    %778 = vsyncpa %s777, 1

</llo_original>
